<compile_context>
chip_gen: v7x
topology: tpu7x:2x2x1
jax: 0.10.0
libtpu: 0.0.40
codegen_flags: <defaults>
</compile_context>

<pallas_src>
import functools

import jax
import jax.numpy as jnp
from jax.experimental import pallas as pl
from jax.experimental.pallas import tpu as pltpu


# Conservative, generation-agnostic VMEM sizing:
#   v5e/v6e physical VMEM = 128 MiB, v7x = 64 MiB (default scoped 16/32/32 MiB).
_VMEM_LIMIT_BYTES = 48 * 1024 * 1024      # explicit scoped limit, headroom on v7x
_X_BLOCK_BUDGET_BYTES = 18 * 1024 * 1024  # per input buffer; x is double-buffered


# ---------------------------------------------------------------------------
# Fused kernel
# ---------------------------------------------------------------------------
def _multi_center_kernel(x_ref, w_ref, b_ref, loss_ref, acc_ref, *,
                         hw, thw, eps, needs_mask):
    # x_ref  : (B, C, thw) spatial tile of the flattened input (native dtype)
    # w_ref  : (C, K) = myfc.weight.T  (also the "myfc_w" used for centers)
    # b_ref  : (1, K) = myfc.bias
    # loss_ref: (1, 1) scalar MSE loss
    # acc_ref : (B, C) f32 spatial-sum accumulator (VMEM scratch)
    i = pl.program_id(0)

    @pl.when(i == 0)
    def _():
        acc_ref[...] = jnp.zeros_like(acc_ref)

    # Stream native dtype, upcast at the accumulate (f32 accumulator).
    xt = x_ref[...].astype(jnp.float32)
    if needs_mask:
        # Ragged tail of the last tile: zero out lanes past the true H*W.
        pos = i * thw + jax.lax.broadcasted_iota(jnp.int32, xt.shape, 2)
        xt = jnp.where(pos < hw, xt, 0.0)
    acc_ref[...] += jnp.sum(xt, axis=-1)

    @pl.when(i == pl.num_programs(0) - 1)
    def _():
        B, C = acc_ref.shape
        K = w_ref.shape[1]

        # AdaptiveAvgPool2d((1, 1)) -> (B, C)
        pooled = acc_ref[...] * (1.0 / hw)

        # InstanceNorm1d(1): per-sample norm over C, no affine, biased var.
        mean = jnp.mean(pooled, axis=-1, keepdims=True)
        ctr = pooled - mean
        var = jnp.mean(ctr * ctr, axis=-1, keepdims=True)
        normed = ctr * jax.lax.rsqrt(var + eps)

        # myfc: (B, C) @ (C, K) + bias  (MXU, f32 accumulate)
        logits = jnp.dot(normed, w_ref[...],
                         preferred_element_type=jnp.float32) + b_ref[...]

        # argmax of sample 0 (first occurrence, like torch.argmax)
        row0 = logits[0:1, :]                                    # (1, K)
        m0 = jnp.max(row0, axis=-1, keepdims=True)               # (1, 1)
        kids = jax.lax.broadcasted_iota(jnp.int32, (1, K), 1)
        idx0 = jnp.min(jnp.where(row0 == m0, kids, K),
                       axis=-1, keepdims=True)                   # (1, 1)

        # center = myfc_w[idx0, :] via one-hot matmul (no dynamic VMEM gather)
        cids = jax.lax.broadcasted_iota(jnp.int32, (1, C), 1)
        onehot = (cids == idx0).astype(jnp.float32)              # (1, C)
        center = jnp.dot(onehot, w_ref[...],
                         preferred_element_type=jnp.float32)     # (1, K)

        # MSELoss(logits, center broadcast over batch), reduction='mean'
        diff = logits - center
        total = jnp.sum(jnp.sum(diff * diff, axis=-1, keepdims=True),
                        axis=0, keepdims=True)                   # (1, 1)
        loss_ref[...] = total * (1.0 / (B * K))


# ---------------------------------------------------------------------------
# Wrapper
# ---------------------------------------------------------------------------
def multi_center_forward(params, x, *, eps=1e-5,
                         block_budget_bytes=_X_BLOCK_BUDGET_BYTES,
                         vmem_limit_bytes=_VMEM_LIMIT_BYTES):
    """Forward pass matching multi_center.forward. x is NCHW; returns scalar."""
    w, b = params                       # w: (K, C), b: (K,)
    K, C = w.shape
    B, C_in, H, W = x.shape
    assert C_in == C, (C_in, C)
    HW = H * W

    # Flatten spatial dims only — free reshape, native dtype, no pad, no cast.
    x3 = x.reshape(B, C, HW)
    elt = jnp.dtype(x.dtype).itemsize
    bytes_per_lane = B * C * elt
    max_thw = max(1, block_budget_bytes // bytes_per_lane)

    if HW <= max_thw:
        # Whole spatial axis in one block: last dim equals the full array dim,
        # so the (8,128) constraint does not apply and no mask is needed.
        thw = HW
        grid = (1,)
        needs_mask = False
    else:
        # Large lane-dense 128-multiple tiles; mask the ragged tail in-kernel.
        thw = max(128, (max_thw // 128) * 128)
        grid = (pl.cdiv(HW, thw),)
        needs_mask = (HW % thw) != 0

    # Hoisted layout prep (in a real model: store params pre-transposed).
    w_t = jnp.transpose(w).astype(jnp.float32)     # (C, K) == myfc_w
    b_row = b.reshape(1, K).astype(jnp.float32)

    kernel = functools.partial(_multi_center_kernel, hw=HW, thw=thw,
                               eps=eps, needs_mask=needs_mask)

    loss = pl.pallas_call(
        kernel,
        out_shape=jax.ShapeDtypeStruct((1, 1), jnp.float32),
        grid_spec=pltpu.PrefetchScalarGridSpec(
            num_scalar_prefetch=0,
            grid=grid,
            in_specs=[
                # Streaming input: auto double-buffered tiles over H*W.
                pl.BlockSpec((B, C, thw), lambda i: (0, 0, i)),
                # Tiny constants: whole array resident in VMEM, fetched once.
                pl.BlockSpec(memory_space=pltpu.MemorySpace.VMEM),
                pl.BlockSpec(memory_space=pltpu.MemorySpace.VMEM),
            ],
            out_specs=pl.BlockSpec((1, 1), lambda i: (0, 0)),
            scratch_shapes=[pltpu.VMEM((B, C), jnp.float32)],
        ),
        compiler_params=pltpu.CompilerParams(
            dimension_semantics=("arbitrary",),   # reduction axis w/ accumulator
            vmem_limit_bytes=vmem_limit_bytes,
        ),
        cost_estimate=pl.CostEstimate(
            flops=B * C * HW + 2 * B * C * K + 2 * C * K,
            transcendentals=B,
            bytes_accessed=elt * B * C * HW + 4 * (C * K + K + 1),
        ),
    )(x3, w_t, b_row)
    return loss[0, 0]


# ---------------------------------------------------------------------------
# Parameter init (mirrors the PyTorch module's myfc init)
# ---------------------------------------------------------------------------
def init_multi_center_params(key, inc, center_num):
    wkey, bkey = jax.random.split(key)
    w = 0.1 * jax.random.normal(wkey, (center_num, inc), jnp.float32)
    bound = 1.0 / (inc ** 0.5)
    b = jax.random.uniform(bkey, (center_num,), jnp.float32, -bound, bound)
    return (w, b)


# ---------------------------------------------------------------------------
# Pure-JAX reference (for correctness check)
# ---------------------------------------------------------------------------
def _reference_forward(params, x, eps=1e-5):
    w, b = params                                     # (K, C), (K,)
    pooled = jnp.mean(x.astype(jnp.float32), axis=(2, 3))   # AdaptiveAvgPool2d
    mean = jnp.mean(pooled, axis=-1, keepdims=True)   # InstanceNorm1d(1)
    var = jnp.mean((pooled - mean) ** 2, axis=-1, keepdims=True)
    normed = (pooled - mean) / jnp.sqrt(var + eps)
    logits = normed @ w.T + b                         # myfc
    myfc_w = w.T                                      # (C, K)
    idx0 = jnp.argmax(logits[0])
    center = myfc_w[idx0, :]                          # (K,)
    return jnp.mean((logits - center) ** 2)           # MSELoss


if __name__ == "__main__":
    key = jax.random.PRNGKey(0)
    B, C, H, W = 2, 32, 16, 17     # inc = 32, HW = 272 (not a 128-multiple)
    K = 8                          # center_num

    pkey, xkey = jax.random.split(key)
    params = init_multi_center_params(pkey, inc=C, center_num=K)
    x = jax.random.normal(xkey, (B, C, H, W), dtype=jnp.float32)

    ref = jax.block_until_ready(_reference_forward(params, x))

    # Path 1 (default sizing): whole H*W fits one VMEM block -> grid=(1,),
    # no padding, no mask.
    loss1 = jax.block_until_ready(multi_center_forward(params, x))

    # Path 2: force the tiled path (128-wide tiles + in-kernel ragged-tail
    # mask) by shrinking the per-block budget, to exercise both code paths.
    loss2 = jax.block_until_ready(
        multi_center_forward(params, x, block_budget_bytes=32 * 1024))

    for loss in (loss1, loss2):
        assert jnp.isfinite(loss), float(loss)
        assert jnp.allclose(loss, ref, atol=1e-5, rtol=1e-4), (
            float(loss), float(ref))

    print("KERNEL_OK")
</pallas_src>

<mosaic_0001>
module attributes {stable_mosaic.version = 11 : i64} {
  func.func @_multi_center_kernel(%arg0: i32, %arg1: memref<2x32x272xf32, #tpu.memory_space<vmem>>, %arg2: memref<32x8xf32, #tpu.memory_space<vmem>>, %arg3: memref<1x8xf32, #tpu.memory_space<vmem>>, %arg4: memref<1x1xf32, #tpu.memory_space<vmem>>, %arg5: memref<2x32xf32, #tpu.memory_space<vmem>>) attributes {dimension_semantics = [#tpu.dimension_semantics<arbitrary>], iteration_bounds = array<i64: 1>, scalar_prefetch = 0 : i64, scratch_operands = 1 : i64, tpu.core_type = #tpu.core_type<tc>, window_params = [{transform_indices = @transform_0, window_bounds = array<i64: 2, 32, 272>}, {pipeline_mode = #tpu.pipeline_mode<synchronous>, transform_indices = @transform_1, window_bounds = array<i64: 32, 8>}, {pipeline_mode = #tpu.pipeline_mode<synchronous>, transform_indices = @transform_2, window_bounds = array<i64: 1, 8>}, {pipeline_mode = #tpu.pipeline_mode<synchronous>, transform_indices = @transform_3, window_bounds = array<i64: 1, 1>}]} {
    %c0_i32 = arith.constant 0 : i32
    %0 = arith.cmpi eq, %arg0, %c0_i32 : i32
    %1 = arith.extui %0 : i1 to i32
    %c0_i32_0 = arith.constant 0 : i32
    %2 = arith.cmpi ne, %1, %c0_i32_0 : i32
    scf.if %2 {
      %cst_9 = arith.constant 0.000000e+00 : f32
      %11 = vector.broadcast %cst_9 : f32 to vector<2x32xf32>
      %c0_10 = arith.constant 0 : index
      %c0_11 = arith.constant 0 : index
      %12 = vector.load %arg5[%c0_10, %c0_11] : memref<2x32xf32, #tpu.memory_space<vmem>>, vector<2x32xf32>
      tpu.vector_store %arg5[%c0_10, %c0_11], %11 {strides = array<i32>} : memref<2x32xf32, #tpu.memory_space<vmem>>, vector<2x32xf32>,
    } else {
    }
    %c0 = arith.constant 0 : index
    %c0_1 = arith.constant 0 : index
    %c0_2 = arith.constant 0 : index
    %3 = vector.load %arg1[%c0, %c0_1, %c0_2] : memref<2x32x272xf32, #tpu.memory_space<vmem>>, vector<2x32x272xf32>
    %c0_3 = arith.constant 0 : index
    %c0_4 = arith.constant 0 : index
    %4 = vector.load %arg5[%c0_3, %c0_4] : memref<2x32xf32, #tpu.memory_space<vmem>>, vector<2x32xf32>
    %cst = arith.constant dense<0.000000e+00> : vector<2x32xf32>
    %5 = vector.multi_reduction <add>, %3, %cst [2] : vector<2x32x272xf32> to vector<2x32xf32>
    %6 = arith.addf %4, %5 : vector<2x32xf32>
    %c0_5 = arith.constant 0 : index
    %c0_6 = arith.constant 0 : index
    %7 = vector.load %arg5[%c0_5, %c0_6] : memref<2x32xf32, #tpu.memory_space<vmem>>, vector<2x32xf32>
    tpu.vector_store %arg5[%c0_5, %c0_6], %6 {strides = array<i32>} : memref<2x32xf32, #tpu.memory_space<vmem>>, vector<2x32xf32>,
    %c0_i32_7 = arith.constant 0 : i32
    %8 = arith.cmpi eq, %arg0, %c0_i32_7 : i32
    %9 = arith.extui %8 : i1 to i32
    %c0_i32_8 = arith.constant 0 : i32
    %10 = arith.cmpi ne, %9, %c0_i32_8 : i32
    scf.if %10 {
      %c0_9 = arith.constant 0 : index
      %c0_10 = arith.constant 0 : index
      %11 = vector.load %arg5[%c0_9, %c0_10] : memref<2x32xf32, #tpu.memory_space<vmem>>, vector<2x32xf32>
      %cst_11 = arith.constant 0.0036764706 : f32
      %12 = vector.broadcast %cst_11 : f32 to vector<2x32xf32>
      %13 = arith.mulf %11, %12 : vector<2x32xf32>
      %cst_12 = arith.constant dense<0.000000e+00> : vector<2xf32>
      %14 = vector.multi_reduction <add>, %13, %cst_12 [1] : vector<2x32xf32> to vector<2xf32>
      %15 = vector.shape_cast %14 : vector<2xf32> to vector<2x1xf32>
      %cst_13 = arith.constant 3.200000e+01 : f32
      %16 = vector.broadcast %cst_13 : f32 to vector<2x1xf32>
      %17 = arith.divf %15, %16 : vector<2x1xf32>
      %18 = vector.broadcast %17 : vector<2x1xf32> to vector<2x32xf32>
      %19 = arith.subf %13, %18 : vector<2x32xf32>
      %20 = arith.mulf %19, %19 : vector<2x32xf32>
      %cst_14 = arith.constant dense<0.000000e+00> : vector<2xf32>
      %21 = vector.multi_reduction <add>, %20, %cst_14 [1] : vector<2x32xf32> to vector<2xf32>
      %22 = vector.shape_cast %21 : vector<2xf32> to vector<2x1xf32>
      %cst_15 = arith.constant 3.200000e+01 : f32
      %23 = vector.broadcast %cst_15 : f32 to vector<2x1xf32>
      %24 = arith.divf %22, %23 : vector<2x1xf32>
      %cst_16 = arith.constant 9.99999974E-6 : f32
      %25 = vector.broadcast %cst_16 : f32 to vector<2x1xf32>
      %26 = arith.addf %24, %25 : vector<2x1xf32>
      %27 = math.rsqrt %26 : vector<2x1xf32>
      %28 = vector.broadcast %27 : vector<2x1xf32> to vector<2x32xf32>
      %29 = arith.mulf %19, %28 : vector<2x32xf32>
      %c0_17 = arith.constant 0 : index
      %c0_18 = arith.constant 0 : index
      %30 = vector.load %arg2[%c0_17, %c0_18] : memref<32x8xf32, #tpu.memory_space<vmem>>, vector<32x8xf32>
      %cst_19 = arith.constant dense<0.000000e+00> : vector<2x8xf32>
      %31 = tpu.matmul %29, %30, %cst_19 {dimension_numbers = #tpu.dot_dimension_numbers<[1], [0], [0], [1], [0, 0, 1, 1], [], []>} : vector<2x32xf32>, vector<32x8xf32>, vector<2x8xf32> -> vector<2x8xf32>
      %c0_20 = arith.constant 0 : index
      %c0_21 = arith.constant 0 : index
      %32 = vector.load %arg3[%c0_20, %c0_21] : memref<1x8xf32, #tpu.memory_space<vmem>>, vector<1x8xf32>
      %33 = vector.broadcast %32 : vector<1x8xf32> to vector<2x8xf32>
      %34 = arith.addf %31, %33 : vector<2x8xf32>
      %35 = vector.extract_strided_slice %34 {offsets = [0, 0], sizes = [1, 8], strides = [1, 1]} : vector<2x8xf32> to vector<1x8xf32>
      %cst_22 = arith.constant dense<0xFF800000> : vector<1xf32>
      %36 = vector.multi_reduction <maximumf>, %35, %cst_22 [1] : vector<1x8xf32> to vector<1xf32>
      %37 = vector.shape_cast %36 : vector<1xf32> to vector<1x1xf32>
      %38 = tpu.iota {dimensions = array<i32: 1>} : vector<1x8xi32>
      %39 = vector.broadcast %37 : vector<1x1xf32> to vector<1x8xf32>
      %40 = arith.cmpf oeq, %35, %39 : vector<1x8xf32>
      %c8_i32 = arith.constant 8 : i32
      %41 = vector.broadcast %c8_i32 : i32 to vector<1x8xi32>
      %42 = arith.select %40, %38, %41 : vector<1x8xi1>, vector<1x8xi32>
      %cst_23 = arith.constant dense<2147483647> : vector<1xi32>
      %43 = vector.multi_reduction <minsi>, %42, %cst_23 [1] : vector<1x8xi32> to vector<1xi32>
      %44 = vector.shape_cast %43 : vector<1xi32> to vector<1x1xi32>
      %45 = tpu.iota {dimensions = array<i32: 1>} : vector<1x32xi32>
      %46 = vector.broadcast %44 : vector<1x1xi32> to vector<1x32xi32>
      %47 = arith.cmpi eq, %45, %46 : vector<1x32xi32>
      %48 = arith.extui %47 : vector<1x32xi1> to vector<1x32xi32>
      %49 = arith.sitofp %48 : vector<1x32xi32> to vector<1x32xf32>
      %c0_24 = arith.constant 0 : index
      %c0_25 = arith.constant 0 : index
      %50 = vector.load %arg2[%c0_24, %c0_25] : memref<32x8xf32, #tpu.memory_space<vmem>>, vector<32x8xf32>
      %cst_26 = arith.constant dense<0.000000e+00> : vector<1x8xf32>
      %51 = tpu.matmul %49, %50, %cst_26 {dimension_numbers = #tpu.dot_dimension_numbers<[1], [0], [0], [1], [0, 0, 1, 1], [], []>} : vector<1x32xf32>, vector<32x8xf32>, vector<1x8xf32> -> vector<1x8xf32>
      %52 = vector.broadcast %51 : vector<1x8xf32> to vector<2x8xf32>
      %53 = arith.subf %34, %52 : vector<2x8xf32>
      %54 = arith.mulf %53, %53 : vector<2x8xf32>
      %cst_27 = arith.constant dense<0.000000e+00> : vector<2xf32>
      %55 = vector.multi_reduction <add>, %54, %cst_27 [1] : vector<2x8xf32> to vector<2xf32>
      %56 = vector.shape_cast %55 : vector<2xf32> to vector<2x1xf32>
      %cst_28 = arith.constant dense<0.000000e+00> : vector<1xf32>
      %57 = vector.multi_reduction <add>, %56, %cst_28 [0] : vector<2x1xf32> to vector<1xf32>
      %58 = vector.shape_cast %57 : vector<1xf32> to vector<1x1xf32>
      %cst_29 = arith.constant 6.250000e-02 : f32
      %59 = vector.broadcast %cst_29 : f32 to vector<1x1xf32>
      %60 = arith.mulf %58, %59 : vector<1x1xf32>
      %c0_30 = arith.constant 0 : index
      %c0_31 = arith.constant 0 : index
      %61 = vector.load %arg4[%c0_30, %c0_31] : memref<1x1xf32, #tpu.memory_space<vmem>>, vector<1x1xf32>
      tpu.vector_store %arg4[%c0_30, %c0_31], %60 {strides = array<i32>} : memref<1x1xf32, #tpu.memory_space<vmem>>, vector<1x1xf32>,
    } else {
    }
    return
  }
  func.func @transform_0(%arg0: i32) -> (i32, i32, i32) {
    %c0_i32 = arith.constant 0 : i32
    %c0_i32_0 = arith.constant 0 : i32
    %c0_i32_1 = arith.constant 0 : i32
    return %c0_i32, %c0_i32_0, %arg0 : i32, i32, i32
  }
  func.func @transform_1(%arg0: i32) -> (i32, i32) {
    %c0_i32 = arith.constant 0 : i32
    %c0_i32_0 = arith.constant 0 : i32
    %c0_i32_1 = arith.constant 0 : i32
    return %c0_i32, %c0_i32_0 : i32, i32
  }
  func.func @transform_2(%arg0: i32) -> (i32, i32) {
    %c0_i32 = arith.constant 0 : i32
    %c0_i32_0 = arith.constant 0 : i32
    %c0_i32_1 = arith.constant 0 : i32
    return %c0_i32, %c0_i32_0 : i32, i32
  }
  func.func @transform_3(%arg0: i32) -> (i32, i32) {
    %c0_i32 = arith.constant 0 : i32
    %c0_i32_0 = arith.constant 0 : i32
    %c0_i32_1 = arith.constant 0 : i32
    return %c0_i32, %c0_i32_0 : i32, i32
  }
}

</mosaic_0001>

<llo_original>
// kernel: tpu_custom_call.1
$region0: #{tpu_custom_call.1}
  #allocation0 [shape = 'u32[]', space=smem, size = 0x4, offset = 0x4, fixed_abs, tag = 'smem constant byte address 0x4 - core index']
  #allocation1 [shape = 'u32[144,128]{1,0:T(1,128)}', space=vmem, size = 0x12000, scoped, tag = 'internal scratch']
  #allocation2 [shape = 'f32[2,32]{1,0:T(2,128)}', space=vmem, size = 0x400, scoped, tag = 'scratch operand']
  %s0 = inlined_call_operand.hbm [shape: f32[2,32,272], index: 0, kind: input, shape index: {}]
  %s1 = inlined_call_operand.vmem [shape: f32[32,8], index: 1, kind: input, shape index: {}]
  %s2 = inlined_call_operand.vmem [shape: f32[1,8], index: 2, kind: input, shape index: {}]
  %s3 = inlined_call_operand.hbm [shape: f32[1,1], index: 3, kind: output, shape index: {}]
  %s4 = sld [smem:[#allocation0]]
  $region34: #{tpu_custom_call.1} parent=0
    _
  %s6 = ssub.s32 1, %s4
  %s7 = scalar_select 0, %s6, %s4
  $region1: #{tpu_custom_call.1} parent=0
    #allocation3 [shape = 'u8[98304]{0}', space=vmem, size = 0x18000, scoped, tag = 'input window, operand 0, single buffered']
    #allocation4 [shape = 's32[1]{0}', space=sflag, size = 0x4, scoped, tag = 'scoped memory for tpu_custom_call.1']
    #allocation5 [shape = 's32[1]{0}', space=sflag, size = 0x4, scoped, tag = 'scoped memory for tpu_custom_call.1']
    #allocation6 [shape = 'u8[512]{0}', space=vmem, size = 0x400, scoped, tag = 'output window, operand 0, single buffered']
    %8 = vsyncpa [#allocation4], 0
    %9 = vsyncpa [#allocation5], 0
    // Predicated region
    $region2: #{tpu_custom_call.1} parent=1 // pred_check
      _
    $region3: #{tpu_custom_call.1} parent=1 // pred_check_branch
      %11 = sbr.rel (0) target = $region5
    $region4: #{tpu_custom_call.1} parent=1 // pred_region
      %s13 = ssub.s32 3072, 3072
      %14 = vsyncadd [#allocation4], %s13
      %s15 = sshll.u32 [#allocation3], 4
      %s16 = int_to_ptr.vmem [resolvable:$true] %s15
      %21 = dma.hbm_to_vmem [thread:$0]  %s0, 3072, %s16, [#allocation4], 384, 384, 24
    $region5: #{tpu_custom_call.1} parent=1 // pred_fallthru
      _
    // Predicated region
    $region6: #{tpu_custom_call.1} parent=1 // pred_check
      _
    $region7: #{tpu_custom_call.1} parent=1 // pred_check_branch
      %23 = sbr.rel (0) target = $region9
    $region8: #{tpu_custom_call.1} parent=1 // pred_region
      _
    $region9: #{tpu_custom_call.1} parent=1 // pred_fallthru
      _
    // Predicated region
    $region10: #{tpu_custom_call.1} parent=1 // pred_check
      _
    $region11: #{tpu_custom_call.1} parent=1 // pred_check_branch
      %25 = sbr.rel (0) target = $region13
    $region12: #{tpu_custom_call.1} parent=1 // pred_region
      _
    $region13: #{tpu_custom_call.1} parent=1 // pred_fallthru
      _
    // Predicated region
    $region14: #{tpu_custom_call.1} parent=1 // pred_check
      _
    $region15: #{tpu_custom_call.1} parent=1 // pred_check_branch
      %27 = sbr.rel (0) target = $region17
    $region16: #{tpu_custom_call.1} parent=1 // pred_region
      %28 = dma.done [#allocation4], 3072
    $region17: #{tpu_custom_call.1} parent=1 // pred_fallthru
      _
    %p29 = scmp.eq.s32.totalorder 0, 0
    // Predicated region
    $region18: #{tpu_custom_call.1} parent=1 // pred_check
      %p30 = pneg %p29
    $region19: #{tpu_custom_call.1} parent=1 // pred_check_branch
      %32 = sbr.rel (%p30) target = $region21
    $region20: #{tpu_custom_call.1} parent=1 // pred_region
      %vm33 = vcmask 254976
      %34 = vst.msk [vmem:[#allocation2] sm:$0x3] %vm33, 0.0
    $region21: #{tpu_custom_call.1} parent=1 // pred_fallthru
      _
    %v35 = vld [vmem:[#allocation3] sm:$0xff]
    %v36 = vld [vmem:[#allocation3 + $0x8] sm:$0xff]
    %v37 = vld [vmem:[#allocation3 + $0x10] sm:$0xff]
    %v38 = vld [vmem:[#allocation3 + $0x18] sm:$0xff]
    %v39 = vld [vmem:[#allocation3 + $0x20] sm:$0xff]
    %v40 = vld [vmem:[#allocation3 + $0x28] sm:$0xff]
    %v41 = vld [vmem:[#allocation3 + $0x30] sm:$0xff]
    %v42 = vld [vmem:[#allocation3 + $0x38] sm:$0xff]
    %v43 = vld [vmem:[#allocation3 + $0x40] sm:$0xff]
    %v44 = vld [vmem:[#allocation3 + $0x48] sm:$0xff]
    %v45 = vld [vmem:[#allocation3 + $0x50] sm:$0xff]
    %v46 = vld [vmem:[#allocation3 + $0x58] sm:$0xff]
    %v47 = vld [vmem:[#allocation3 + $0x60] sm:$0xff]
    %v48 = vld [vmem:[#allocation3 + $0x68] sm:$0xff]
    %v49 = vld [vmem:[#allocation3 + $0x70] sm:$0xff]
    %v50 = vld [vmem:[#allocation3 + $0x78] sm:$0xff]
    %v51 = vld [vmem:[#allocation3 + $0x80] sm:$0xff]
    %v52 = vld [vmem:[#allocation3 + $0x88] sm:$0xff]
    %v53 = vld [vmem:[#allocation3 + $0x90] sm:$0xff]
    %v54 = vld [vmem:[#allocation3 + $0x98] sm:$0xff]
    %v55 = vld [vmem:[#allocation3 + $0xa0] sm:$0xff]
    %v56 = vld [vmem:[#allocation3 + $0xa8] sm:$0xff]
    %v57 = vld [vmem:[#allocation3 + $0xb0] sm:$0xff]
    %v58 = vld [vmem:[#allocation3 + $0xb8] sm:$0xff]
    %v59 = vld [vmem:[#allocation2] sm:$0x3]
    %v60 = vadd.f32 %v35, %v36
    %vm61 = vcmask 130048
    %v62 = vsel %vm61, %v37, 0.0
    %v63 = vadd.f32 %v60, %v62
    %64 = vadd.xlane.f32.xlu0 %v63
    %v65 = vpop.xlane.xlu0 %64
    %v66 = vadd.f32 %v38, %v39
    %v67 = vsel %vm61, %v40, 0.0
    %v68 = vadd.f32 %v66, %v67
    %69 = vadd.xlane.f32.xlu0 %v68
    %v70 = vpop.xlane.xlu0 %69
    %v71 = vadd.f32 %v41, %v42
    %v72 = vsel %vm61, %v43, 0.0
    %v73 = vadd.f32 %v71, %v72
    %74 = vadd.xlane.f32.xlu0 %v73
    %v75 = vpop.xlane.xlu0 %74
    %v76 = vadd.f32 %v44, %v45
    %v77 = vsel %vm61, %v46, 0.0
    %v78 = vadd.f32 %v76, %v77
    %79 = vadd.xlane.f32.xlu0 %v78
    %v80 = vpop.xlane.xlu0 %79
    %v81 = vadd.f32 %v47, %v48
    %v82 = vsel %vm61, %v49, 0.0
    %v83 = vadd.f32 %v81, %v82
    %84 = vadd.xlane.f32.xlu0 %v83
    %v85 = vpop.xlane.xlu0 %84
    %v86 = vadd.f32 %v50, %v51
    %v87 = vsel %vm61, %v52, 0.0
    %v88 = vadd.f32 %v86, %v87
    %89 = vadd.xlane.f32.xlu0 %v88
    %v90 = vpop.xlane.xlu0 %89
    %v91 = vadd.f32 %v53, %v54
    %v92 = vsel %vm61, %v55, 0.0
    %v93 = vadd.f32 %v91, %v92
    %94 = vadd.xlane.f32.xlu0 %v93
    %v95 = vpop.xlane.xlu0 %94
    %v96 = vadd.f32 %v56, %v57
    %v97 = vsel %vm61, %v58, 0.0
    %v98 = vadd.f32 %v96, %v97
    %99 = vadd.xlane.f32.xlu0 %v98
    %v100 = vpop.xlane.xlu0 %99
    %v109 = vlaneseq
    %v110 = vand.u32 %v109, 127
    %v111 = vlaneseq
    %v112 = vshrl.u32 %v111, 7
    %v113 = vsub.s32 %v110, %v112
    %v114 = vrot.slane %v65, %v113
    %v115 = vadd.s32 %v110, 4294967288
    %v116 = vlaneseq
    %v117 = vshrl.u32 %v116, 7
    %v118 = vsub.s32 %v115, %v117
    %v119 = vrot.slane %v70, %v118
    %vm120 = vcmask 130112
    %v121 = vsel %vm120, %v119, %v114
    %v122 = vadd.s32 %v110, 4294967280
    %v123 = vlaneseq
    %v124 = vshrl.u32 %v123, 7
    %v125 = vsub.s32 %v122, %v124
    %v126 = vrot.slane %v75, %v125
    %vm127 = vcmask 195712
    %v128 = vsel %vm127, %v126, %v121
    %v129 = vadd.s32 %v110, 4294967272
    %v130 = vlaneseq
    %v131 = vshrl.u32 %v130, 7
    %v132 = vsub.s32 %v129, %v131
    %v133 = vrot.slane %v80, %v132
    %vm134 = vcmask 261312
    %v135 = vsel %vm134, %v133, %v128
    %v136 = vlaneseq
    %v137 = vshrl.u32 %v136, 7
    %v138 = vsub.s32 %v110, %v137
    %v139 = vrot.slane %v85, %v138
    %v140 = vlaneseq
    %v141 = vshrl.u32 %v140, 7
    %v142 = vsub.s32 %v115, %v141
    %v143 = vrot.slane %v90, %v142
    %v144 = vsel %vm120, %v143, %v139
    %v145 = vlaneseq
    %v146 = vshrl.u32 %v145, 7
    %v147 = vsub.s32 %v122, %v146
    %v148 = vrot.slane %v95, %v147
    %v149 = vsel %vm127, %v148, %v144
    %v150 = vlaneseq
    %v151 = vshrl.u32 %v150, 7
    %v152 = vsub.s32 %v129, %v151
    %v153 = vrot.slane %v100, %v152
    %v154 = vsel %vm134, %v153, %v149
    %vm155 = vcmask 1041409
    %v156 = vsel %vm155, %v154, %v135
    %v158 = vadd.f32 %v59, %v156
    %vm159 = vcmask 254976
    %160 = vst.msk [vmem:[#allocation2] sm:$0x3] %vm159, %v158
    // Predicated region
    $region22: #{tpu_custom_call.1} parent=1 // pred_check
      %p161 = pneg %p29
    $region23: #{tpu_custom_call.1} parent=1 // pred_check_branch
      %163 = sbr.rel (%p161) target = $region25
    $region24: #{tpu_custom_call.1} parent=1 // pred_region
      %v164 = vld [vmem:[#allocation2] sm:$0x3]
      %v165 = vmul.f32 %v164, 0.0036764706
      %v166 = vsel %vm159, %v165, 0.0
      %167 = vadd.xlane.f32.xlu0 %v166
      %v168 = vpop.xlane.xlu0 %167
      %v169 = vrcp.pop 32.0
      %v170 = vmul.f32 %v168, %v169
      %v171 = vsub.f32 %v165, %v170
      %v172 = vmul.f32 %v171, %v171
      %v173 = vsel %vm159, %v172, 0.0
      %174 = vadd.xlane.f32.xlu0 %v173
      %v175 = vpop.xlane.xlu0 %174
      %v176 = vmul.f32 %v175, %v169
      %v177 = vadd.f32 %v176, 1e-05
      %v178 = vrsqrt.pop %v177
      %v179 = vmul.f32 %v171, %v178
      %v180 = vld [vmem:[%s1] sm:$0xff]
      %v181 = vld [vmem:[%s1 + $0x8] sm:$0xff]
      %v182 = vld [vmem:[%s1 + $0x10] sm:$0xff]
      %v183 = vld [vmem:[%s1 + $0x18] sm:$0xff]
      %v184 = vld [vmem:[%s2] sm:$0x1]
      %v186 = vlaneseq
      %v187 = vshrl.u32 %v186, 7
      %v188 = vsub.s32 0, %v187
      %v189 = vrot.slane %v184, %v188
      %vm191 = vcmask 261120
      %v193 = vsel %vm191, %v179, 0
      %195 = vmatprep.subr.mxu0 0.0
      %196 = vmatpush1.msra.mxu0 %v180
      %197 = vmatprep.subr.mxu0 0.0
      %198 = vmatpush1.msra.mxu0 %v181
      %199 = vmatprep.subr.mxu0 0.0
      %200 = vmatpush1.msra.mxu0 %v182
      %201 = vmatprep.subr.mxu0 0.0
      %202 = vmatpush1.msra.mxu0 %v183
      %203 = vmatprep.subr.mxu0 0.0
      %204 = vmatpush1.msra.mxu0 0.0
      %205 = vmatprep.subr.mxu0 0.0
      %206 = vmatpush1.msra.mxu0 0.0
      %207 = vmatprep.subr.mxu0 0.0
      %208 = vmatpush1.msra.mxu0 0.0
      %209 = vmatprep.subr.mxu0 0.0
      %210 = vmatpush1.msra.mxu0 0.0
      %211 = vmatprep.subr.mxu0 0.0
      %212 = vmatpush1.msra.mxu0 0.0
      %213 = vmatprep.subr.mxu0 0.0
      %214 = vmatpush1.msra.mxu0 0.0
      %215 = vmatprep.subr.mxu0 0.0
      %216 = vmatpush1.msra.mxu0 0.0
      %217 = vmatprep.subr.mxu0 0.0
      %218 = vmatpush1.msra.mxu0 0.0
      %219 = vmatprep.subr.mxu0 0.0
      %220 = vmatpush1.msra.mxu0 0.0
      %221 = vmatprep.subr.mxu0 0.0
      %222 = vmatpush1.msra.mxu0 0.0
      %223 = vmatprep.subr.mxu0 0.0
      %224 = vmatpush1.msra.mxu0 0.0
      %225 = vmatprep.subr.mxu0 0.0
      %226 = vmatpush1.msra.mxu0 0.0
      %227 = vmatprep.subr.mxu0 0.0
      %228 = vmatpush1.msra.mxu0 0.0
      %229 = vmatprep.subr.mxu0 0.0
      %230 = vmatpush1.msra.mxu0 0.0
      %231 = vmatprep.subr.mxu0 0.0
      %232 = vmatpush1.msra.mxu0 0.0
      %233 = vmatprep.subr.mxu0 0.0
      %234 = vmatpush1.msra.mxu0 0.0
      %235 = vmatprep.subr.mxu0 0.0
      %236 = vmatpush1.msra.mxu0 0.0
      %237 = vmatprep.subr.mxu0 0.0
      %238 = vmatpush1.msra.mxu0 0.0
      %239 = vmatprep.subr.mxu0 0.0
      %240 = vmatpush1.msra.mxu0 0.0
      %241 = vmatprep.subr.mxu0 0.0
      %242 = vmatpush1.msra.mxu0 0.0
      %243 = vmatprep.subr.mxu0 0.0
      %244 = vmatpush1.msra.mxu0 0.0
      %245 = vmatprep.subr.mxu0 0.0
      %246 = vmatpush1.msra.mxu0 0.0
      %247 = vmatprep.subr.mxu0 0.0
      %248 = vmatpush1.msra.mxu0 0.0
      %249 = vmatprep.subr.mxu0 0.0
      %250 = vmatpush1.msra.mxu0 0.0
      %251 = vmatprep.subr.mxu0 0.0
      %252 = vmatpush1.msra.mxu0 0.0
      %253 = vmatprep.subr.mxu0 0.0
      %254 = vmatpush1.msra.mxu0 0.0
      %255 = vmatprep.subr.mxu0 0.0
      %256 = vmatpush1.msra.mxu0 0.0
      %257 = vmatprep.subr.mxu0 0.0
      %258 = vmatpush1.msra.mxu0 0.0
      %259 = vmatprep.mubr.f32.mxu0 0.0
      %260 = vmatmul.mubr.f32.gmra.mrb[0].mxu0 %v193
      %v261 = vpop.f32.mrb[0].mxu0
      %v262 = vadd.f32 %v189, %v261
      %v263 = vpop.f32.mrb[0].mxu0
      %264 = vdwg.mxu0
      %vm265 = vcmask 57344
      %v266 = vsel %vm265, %v262, -inf
      %267 = vmax.xlane.f32.xlu0 %v266
      %v268 = vpop.xlane.xlu0 %267
      %vm269 = vcmp.eq.f32.partialorder %v262, %v268
      %v270 = vsel %vm269, %v110, 8
      %v271 = vsel %vm265, %v270, 2147483647
      %v272 = vand.u32 %v271, 65535
      %v273 = vshra.s32 %v271, 16
      %v274 = vcvt.s32.f32 %v272
      %v275 = vcvt.s32.f32 %v273
      %276 = vmin.xlane.f32.xlu0 %v275
      %v277 = vpop.xlane.xlu0 %276
      %vm278 = vcmp.eq.f32.partialorder %v275, %v277
      %v279 = vsel %vm278, %v274, inf
      %280 = vmin.xlane.f32.xlu0 %v279
      %v281 = vpop.xlane.xlu0 %280
      %v282 = vcvt.f32.s32 %v281
      %v283 = vcvt.f32.s32 %v277
      %v284 = vshll.u32 %v283, 16
      %v285 = vadd.s32 %v284, %v282
      %vm286 = vcmp.eq.s32.totalorder %v110, %v285
      %v287 = vsel %vm286, 1, 0
      %v288 = vcvt.s32.f32 %v287
      %v290 = vsel %vm191, %v288, 0
      %292 = vmatprep.subr.mxu0 0.0
      %293 = vmatpush1.msra.mxu0 %v180
      %294 = vmatprep.subr.mxu0 0.0
      %295 = vmatpush1.msra.mxu0 %v181
      %296 = vmatprep.subr.mxu0 0.0
      %297 = vmatpush1.msra.mxu0 %v182
      %298 = vmatprep.subr.mxu0 0.0
      %299 = vmatpush1.msra.mxu0 %v183
      %300 = vmatprep.subr.mxu0 0.0
      %301 = vmatpush1.msra.mxu0 0.0
      %302 = vmatprep.subr.mxu0 0.0
      %303 = vmatpush1.msra.mxu0 0.0
      %304 = vmatprep.subr.mxu0 0.0
      %305 = vmatpush1.msra.mxu0 0.0
      %306 = vmatprep.subr.mxu0 0.0
      %307 = vmatpush1.msra.mxu0 0.0
      %308 = vmatprep.subr.mxu0 0.0
      %309 = vmatpush1.msra.mxu0 0.0
      %310 = vmatprep.subr.mxu0 0.0
      %311 = vmatpush1.msra.mxu0 0.0
      %312 = vmatprep.subr.mxu0 0.0
      %313 = vmatpush1.msra.mxu0 0.0
      %314 = vmatprep.subr.mxu0 0.0
      %315 = vmatpush1.msra.mxu0 0.0
      %316 = vmatprep.subr.mxu0 0.0
      %317 = vmatpush1.msra.mxu0 0.0
      %318 = vmatprep.subr.mxu0 0.0
      %319 = vmatpush1.msra.mxu0 0.0
      %320 = vmatprep.subr.mxu0 0.0
      %321 = vmatpush1.msra.mxu0 0.0
      %322 = vmatprep.subr.mxu0 0.0
      %323 = vmatpush1.msra.mxu0 0.0
      %324 = vmatprep.subr.mxu0 0.0
      %325 = vmatpush1.msra.mxu0 0.0
      %326 = vmatprep.subr.mxu0 0.0
      %327 = vmatpush1.msra.mxu0 0.0
      %328 = vmatprep.subr.mxu0 0.0
      %329 = vmatpush1.msra.mxu0 0.0
      %330 = vmatprep.subr.mxu0 0.0
      %331 = vmatpush1.msra.mxu0 0.0
      %332 = vmatprep.subr.mxu0 0.0
      %333 = vmatpush1.msra.mxu0 0.0
      %334 = vmatprep.subr.mxu0 0.0
      %335 = vmatpush1.msra.mxu0 0.0
      %336 = vmatprep.subr.mxu0 0.0
      %337 = vmatpush1.msra.mxu0 0.0
      %338 = vmatprep.subr.mxu0 0.0
      %339 = vmatpush1.msra.mxu0 0.0
      %340 = vmatprep.subr.mxu0 0.0
      %341 = vmatpush1.msra.mxu0 0.0
      %342 = vmatprep.subr.mxu0 0.0
      %343 = vmatpush1.msra.mxu0 0.0
      %344 = vmatprep.subr.mxu0 0.0
      %345 = vmatpush1.msra.mxu0 0.0
      %346 = vmatprep.subr.mxu0 0.0
      %347 = vmatpush1.msra.mxu0 0.0
      %348 = vmatprep.subr.mxu0 0.0
      %349 = vmatpush1.msra.mxu0 0.0
      %350 = vmatprep.subr.mxu0 0.0
      %351 = vmatpush1.msra.mxu0 0.0
      %352 = vmatprep.subr.mxu0 0.0
      %353 = vmatpush1.msra.mxu0 0.0
      %354 = vmatprep.subr.mxu0 0.0
      %355 = vmatpush1.msra.mxu0 0.0
      %356 = vmatprep.mubr.f32.mxu0 0.0
      %357 = vmatmul.mubr.f32.gmra.mrb[0].mxu0 %v290
      %v358 = vpop.f32.mrb[0].mxu0
      %v359 = vadd.f32 0.0, %v358
      %v360 = vpop.f32.mrb[0].mxu0
      %361 = vdwg.mxu0
      %v362 = vlaneseq
      %v363 = vshrl.u32 %v362, 7
      %v364 = vsub.s32 0, %v363
      %v365 = vrot.slane %v359, %v364
      %v366 = vsub.f32 %v262, %v365
      %v367 = vmul.f32 %v366, %v366
      %vm368 = vcmask 58368
      %v369 = vsel %vm368, %v367, 0.0
      %370 = vadd.xlane.f32.xlu0 %v369
      %v371 = vpop.xlane.xlu0 %370
      %vm372 = vcmask 1041408
      %v373 = vsel %vm372, %v371, 0.0
      %v374 = vrot.slane %v373, 4
      %v375 = vadd.f32 %v373, %v374
      %v376 = vrot.slane %v375, 2
      %v377 = vadd.f32 %v375, %v376
      %v378 = vrot.slane %v377, 1
      %v379 = vadd.f32 %v377, %v378
      %v380 = vmul.f32 %v379, 0.0625
      %vm381 = vcmask 0
      %382 = vst.msk [vmem:[#allocation6] sm:$0x1] %vm381, %v380
    $region25: #{tpu_custom_call.1} parent=1 // pred_fallthru
      _
    // Predicated region
    $region26: #{tpu_custom_call.1} parent=1 // pred_check
      _
    $region27: #{tpu_custom_call.1} parent=1 // pred_check_branch
      %384 = sbr.rel (0) target = $region29
    $region28: #{tpu_custom_call.1} parent=1 // pred_region
      %s386 = ssub.s32 16, 16
      %387 = vsyncadd [#allocation5], %s386
      %s389 = sshll.u32 [#allocation6], 4
      %s390 = int_to_ptr.vmem [resolvable:$true] %s389
      %392 = dma.vmem_to_hbm [thread:$0]  %s390, 16, %s3, [#allocation5]
    $region29: #{tpu_custom_call.1} parent=1 // pred_fallthru
      _
    // Predicated region
    $region30: #{tpu_custom_call.1} parent=1 // pred_check
      _
    $region31: #{tpu_custom_call.1} parent=1 // pred_check_branch
      %394 = sbr.rel (0) target = $region33
    $region32: #{tpu_custom_call.1} parent=1 // pred_region
      %395 = dma.done [#allocation5], 16
    $region33: #{tpu_custom_call.1} parent=1 // pred_fallthru
      _
    %396 = vsyncpa [#allocation4], 1
    %397 = vsyncpa [#allocation5], 1

</llo_original>
